<compile_context>
chip_gen: v7x
topology: tpu7x:2x2x1
jax: 0.10.0
libtpu: 0.0.40
codegen_flags: <defaults>
</compile_context>

<pallas_src>
import jax
import jax.numpy as jnp
from jax.experimental import pallas as pl
from jax.experimental.pallas import tpu as pltpu

HIDDEN = 50        # logical hidden width of the module
N_CLASSES = 6      # logical output width of the module
HID_PAD = 128      # lane-aligned hidden width used inside the kernel
OUT_PAD = 128      # lane-aligned output-slab width used inside the kernel
HALF = OUT_PAD // 2  # p is packed into lanes [HALF, HALF + N_CLASSES)


def _round_up(n, m):
    return ((n + m - 1) // m) * m


def _make_kernel(n_classes, half):
    """Builds the fused MLP-forward kernel (closes over packing constants)."""

    def kernel(x_ref,
               w1_ref, b1_ref,
               w2_ref, b2_ref,
               w3_ref, b3_ref,
               w4_ref, b4_ref,
               out_ref):
        cdt = w1_ref.dtype                      # matmul operand dtype (bf16)
        x = x_ref[...].astype(cdt)              # (TM, Fin)

        # h1 + ReLU   (dropout = identity at inference)
        h = jnp.dot(x, w1_ref[...], preferred_element_type=jnp.float32) + b1_ref[...]
        h = jnp.maximum(h, 0.0)

        # h2 + ReLU
        h = jnp.dot(h.astype(cdt), w2_ref[...],
                    preferred_element_type=jnp.float32) + b2_ref[...]
        h = jnp.maximum(h, 0.0)

        # h3 + ReLU
        h = jnp.dot(h.astype(cdt), w3_ref[...],
                    preferred_element_type=jnp.float32) + b3_ref[...]
        h = jnp.maximum(h, 0.0)

        # last_layer pre-activations z; padded lanes (n_classes:) are exactly 0
        z = jnp.dot(h.astype(cdt), w4_ref[...],
                    preferred_element_type=jnp.float32) + b4_ref[...]

        tm, out_pad = z.shape

        # Masked softmax over the real `n_classes` lanes: padded lanes get
        # -inf so exp() zeroes them with no extra select.
        col = jax.lax.broadcasted_iota(jnp.int32, (tm, out_pad), 1)
        zm = jnp.where(col < n_classes, z, -jnp.inf)
        m = jnp.max(zm, axis=-1, keepdims=True)
        e = jnp.exp(zm - m)                     # exp(-inf) == 0 masks padding
        denom = jnp.sum(e, axis=-1, keepdims=True)

        # EUP approximate reciprocal + one Newton-Raphson step (~f32 precision)
        inv = pl.reciprocal(denom, approx=True)
        inv = inv * (2.0 - denom * inv)
        p = e * inv                             # zeros outside lanes [0, n_classes)

        # Pack z (lanes 0:n_classes) and p (lanes half:half+n_classes) into ONE
        # lane-dense 128-wide slab.  Both operands are exactly zero outside
        # their valid lanes, so a single add performs the merge (no select),
        # and we issue one full-width unmasked store per tile.
        p_shift = pltpu.roll(p, shift=half, axis=1)
        out_ref[...] = z + p_shift

    return kernel


def standard_forward(x, packed, n_classes=N_CLASSES, *, block_rows=1024):
    """x: [B, in_features] float32.  packed: lane-padded params from pack_params.

    Returns (z, p), each of shape [B, n_classes], float32.
    """
    B, fin = x.shape
    hid = packed["w1"].shape[1]
    out_pad = packed["w4"].shape[1]
    half = out_pad // 2
    assert n_classes <= half, "packing requires n_classes <= OUT_PAD // 2"

    # Row tile: multiple of 8 sublanes, capped by requested block_rows.
    tm = min(block_rows, _round_up(B, 8))
    tm = _round_up(tm, 8)

    # VMEM guard (tightest on v7x): double-buffered x tile + output tile must
    # stay well under the scoped-VMEM default.  Budget ~24 MiB for the two
    # pipelined streams; weights are resident and tiny.
    bytes_per_row = 4 * (fin + out_pad)
    max_tm = max(8, ((24 << 20) // (2 * bytes_per_row)) // 8 * 8)
    tm = min(tm, max_tm)

    b_pad = _round_up(B, tm)
    if b_pad != B:
        x = jnp.pad(x, ((0, b_pad - B), (0, 0)))
    grid = (pl.cdiv(b_pad, tm),)

    def pinned(shape):
        # Full-array block, constant index -> stays resident in VMEM.
        return pl.BlockSpec(shape, lambda i: (0, 0))

    in_specs = [
        pl.BlockSpec((tm, fin), lambda i: (i, 0)),      # x tile
        pinned(packed["w1"].shape), pinned(packed["b1"].shape),
        pinned(packed["w2"].shape), pinned(packed["b2"].shape),
        pinned(packed["w3"].shape), pinned(packed["b3"].shape),
        pinned(packed["w4"].shape), pinned(packed["b4"].shape),
    ]
    out_specs = pl.BlockSpec((tm, out_pad), lambda i: (i, 0))

    # Cost hint (padded shapes = what actually executes).
    flops = 2 * b_pad * (fin * hid + 2 * hid * hid + hid * out_pad)
    weight_bytes = (2 * (fin * hid + 2 * hid * hid + hid * out_pad)   # bf16 weights
                    + 4 * (3 * hid + out_pad))                        # f32 biases
    bytes_accessed = 4 * b_pad * fin + 4 * b_pad * out_pad + weight_bytes
    cost = pl.CostEstimate(flops=int(flops),
                           transcendentals=int(b_pad * (out_pad + 1)),
                           bytes_accessed=int(bytes_accessed))

    slab = pl.pallas_call(
        _make_kernel(n_classes, half),
        out_shape=jax.ShapeDtypeStruct((b_pad, out_pad), jnp.float32),
        grid=grid,
        in_specs=in_specs,
        out_specs=out_specs,
        compiler_params=pltpu.CompilerParams(
            dimension_semantics=("parallel",)),
        cost_estimate=cost,
    )(x,
      packed["w1"], packed["b1"],
      packed["w2"], packed["b2"],
      packed["w3"], packed["b3"],
      packed["w4"], packed["b4"])

    z = slab[:B, :n_classes]
    p = slab[:B, half:half + n_classes]
    return z, p


def init_params(key, in_features):
    """Deterministic synthetic parameters matching the module's logical shapes.

    Weights are returned already transposed to (in, out); biases as (1, out).
    """
    dims = [(in_features, HIDDEN), (HIDDEN, HIDDEN), (HIDDEN, HIDDEN),
            (HIDDEN, N_CLASSES)]
    params = {}
    for i, (din, dout) in enumerate(dims, start=1):
        key, kw, kb = jax.random.split(key, 3)
        # PyTorch Linear stores weight as (out, in); build that way then transpose.
        w_torch_layout = jax.random.uniform(
            kw, (dout, din), jnp.float32, -1.0, 1.0) / jnp.sqrt(float(din))
        b = jax.random.uniform(
            kb, (dout,), jnp.float32, -1.0, 1.0) / jnp.sqrt(float(din))
        params[f"w{i}"] = jnp.transpose(w_torch_layout)   # (in, out)
        params[f"b{i}"] = b.reshape(1, dout)              # (1, out)
    return params


def pack_params(params, *, matmul_dtype=jnp.bfloat16):
    """Zero-pad hidden/output dims to lane-aligned widths for the kernel.

    Weights are stored in `matmul_dtype` (bf16 -> MXU-native operands, f32
    accumulation in-kernel); biases stay f32 (added after the matmul).
    """
    def pad_to(a, shape):
        return jnp.pad(a, [(0, t - s) for s, t in zip(a.shape, shape)])

    fin = params["w1"].shape[0]
    return {
        "w1": pad_to(params["w1"], (fin, HID_PAD)).astype(matmul_dtype),
        "b1": pad_to(params["b1"], (1, HID_PAD)),
        "w2": pad_to(params["w2"], (HID_PAD, HID_PAD)).astype(matmul_dtype),
        "b2": pad_to(params["b2"], (1, HID_PAD)),
        "w3": pad_to(params["w3"], (HID_PAD, HID_PAD)).astype(matmul_dtype),
        "b3": pad_to(params["b3"], (1, HID_PAD)),
        "w4": pad_to(params["w4"], (HID_PAD, OUT_PAD)).astype(matmul_dtype),
        "b4": pad_to(params["b4"], (1, OUT_PAD)),
    }


def reference_forward(x, params):
    """Pure-JAX reference, exact f32 module math."""
    h = jnp.maximum(x @ params["w1"] + params["b1"], 0.0)
    h = jnp.maximum(h @ params["w2"] + params["b2"], 0.0)
    h = jnp.maximum(h @ params["w3"] + params["b3"], 0.0)
    z = h @ params["w4"] + params["b4"]
    return z, jax.nn.softmax(z, axis=-1)


def reference_forward_emulated(x, params, dtype=jnp.bfloat16):
    """Pure-JAX reference applying the same bf16 operand rounding as the kernel."""
    def mm(a, w):
        return jnp.dot(a.astype(dtype), w.astype(dtype),
                       preferred_element_type=jnp.float32)
    h = jnp.maximum(mm(x, params["w1"]) + params["b1"], 0.0)
    h = jnp.maximum(mm(h, params["w2"]) + params["b2"], 0.0)
    h = jnp.maximum(mm(h, params["w3"]) + params["b3"], 0.0)
    z = mm(h, params["w4"]) + params["b4"]
    return z, jax.nn.softmax(z, axis=-1)


if __name__ == "__main__":
    key = jax.random.PRNGKey(0)
    k_x, k_p = jax.random.split(key)

    batch, in_features = 200, 32
    x = jax.random.normal(k_x, (batch, in_features), jnp.float32)

    params = init_params(k_p, in_features)      # logical (unpadded) params
    packed = pack_params(params)                # lane-padded bf16 kernel params

    # Small demo tile (block_rows=64) so the 1-D grid runs several pipelined
    # steps incl. a padded partial tile; the production default is 1024.
    z, p = standard_forward(x, packed, N_CLASSES, block_rows=64)
    jax.block_until_ready((z, p))

    z_ref, p_ref = reference_forward(x, params)
    z_emu, p_emu = reference_forward_emulated(x, params)

    assert z.shape == (batch, N_CLASSES) and p.shape == (batch, N_CLASSES)
    # Tight check vs. a reference using the same bf16 operand rounding.
    assert jnp.allclose(z, z_emu, atol=2e-3, rtol=2e-3)
    assert jnp.allclose(p, p_emu, atol=2e-3, rtol=2e-3)
    # Loose check vs. the exact f32 module math (bf16 operand error ~1e-2 rel).
    assert jnp.allclose(z, z_ref, atol=5e-2, rtol=5e-2)
    assert jnp.allclose(p, p_ref, atol=5e-2, rtol=5e-2)

    print("KERNEL_OK")
</pallas_src>

<mosaic_0001>
module attributes {stable_mosaic.version = 11 : i64} {
  func.func @kernel(%arg0: i32, %arg1: memref<64x32xf32, #tpu.memory_space<vmem>>, %arg2: memref<32x128xbf16, #tpu.memory_space<vmem>>, %arg3: memref<1x128xf32, #tpu.memory_space<vmem>>, %arg4: memref<128x128xbf16, #tpu.memory_space<vmem>>, %arg5: memref<1x128xf32, #tpu.memory_space<vmem>>, %arg6: memref<128x128xbf16, #tpu.memory_space<vmem>>, %arg7: memref<1x128xf32, #tpu.memory_space<vmem>>, %arg8: memref<128x128xbf16, #tpu.memory_space<vmem>>, %arg9: memref<1x128xf32, #tpu.memory_space<vmem>>, %arg10: memref<64x128xf32, #tpu.memory_space<vmem>>) attributes {dimension_semantics = [#tpu.dimension_semantics<parallel>], iteration_bounds = array<i64: 4>, scalar_prefetch = 0 : i64, scratch_operands = 0 : i64, tpu.core_type = #tpu.core_type<tc>, window_params = [{transform_indices = @transform_0, window_bounds = array<i64: 64, 32>}, {pipeline_mode = #tpu.pipeline_mode<synchronous>, transform_indices = @transform_1, window_bounds = array<i64: 32, 128>}, {pipeline_mode = #tpu.pipeline_mode<synchronous>, transform_indices = @transform_2, window_bounds = array<i64: 1, 128>}, {pipeline_mode = #tpu.pipeline_mode<synchronous>, transform_indices = @transform_3, window_bounds = array<i64: 128, 128>}, {pipeline_mode = #tpu.pipeline_mode<synchronous>, transform_indices = @transform_4, window_bounds = array<i64: 1, 128>}, {pipeline_mode = #tpu.pipeline_mode<synchronous>, transform_indices = @transform_5, window_bounds = array<i64: 128, 128>}, {pipeline_mode = #tpu.pipeline_mode<synchronous>, transform_indices = @transform_6, window_bounds = array<i64: 1, 128>}, {pipeline_mode = #tpu.pipeline_mode<synchronous>, transform_indices = @transform_7, window_bounds = array<i64: 128, 128>}, {pipeline_mode = #tpu.pipeline_mode<synchronous>, transform_indices = @transform_8, window_bounds = array<i64: 1, 128>}, {transform_indices = @transform_9, window_bounds = array<i64: 64, 128>}]} {
    %c0 = arith.constant 0 : index
    %c0_0 = arith.constant 0 : index
    %0 = vector.load %arg1[%c0, %c0_0] : memref<64x32xf32, #tpu.memory_space<vmem>>, vector<64x32xf32>
    %1 = arith.truncf %0 : vector<64x32xf32> to vector<64x32xbf16>
    %c0_1 = arith.constant 0 : index
    %c0_2 = arith.constant 0 : index
    %2 = vector.load %arg2[%c0_1, %c0_2] : memref<32x128xbf16, #tpu.memory_space<vmem>>, vector<32x128xbf16>
    %cst = arith.constant dense<0.000000e+00> : vector<64x128xf32>
    %3 = tpu.matmul %1, %2, %cst {dimension_numbers = #tpu.dot_dimension_numbers<[1], [0], [0], [1], [0, 0, 1, 1], [], []>} : vector<64x32xbf16>, vector<32x128xbf16>, vector<64x128xf32> -> vector<64x128xf32>
    %c0_3 = arith.constant 0 : index
    %c0_4 = arith.constant 0 : index
    %4 = vector.load %arg3[%c0_3, %c0_4] : memref<1x128xf32, #tpu.memory_space<vmem>>, vector<1x128xf32>
    %5 = vector.broadcast %4 : vector<1x128xf32> to vector<64x128xf32>
    %6 = arith.addf %3, %5 : vector<64x128xf32>
    %cst_5 = arith.constant 0.000000e+00 : f32
    %7 = vector.broadcast %cst_5 : f32 to vector<64x128xf32>
    %8 = arith.maximumf %6, %7 : vector<64x128xf32>
    %9 = arith.truncf %8 : vector<64x128xf32> to vector<64x128xbf16>
    %c0_6 = arith.constant 0 : index
    %c0_7 = arith.constant 0 : index
    %10 = vector.load %arg4[%c0_6, %c0_7] : memref<128x128xbf16, #tpu.memory_space<vmem>>, vector<128x128xbf16>
    %cst_8 = arith.constant dense<0.000000e+00> : vector<64x128xf32>
    %11 = tpu.matmul %9, %10, %cst_8 {dimension_numbers = #tpu.dot_dimension_numbers<[1], [0], [0], [1], [0, 0, 1, 1], [], []>} : vector<64x128xbf16>, vector<128x128xbf16>, vector<64x128xf32> -> vector<64x128xf32>
    %c0_9 = arith.constant 0 : index
    %c0_10 = arith.constant 0 : index
    %12 = vector.load %arg5[%c0_9, %c0_10] : memref<1x128xf32, #tpu.memory_space<vmem>>, vector<1x128xf32>
    %13 = vector.broadcast %12 : vector<1x128xf32> to vector<64x128xf32>
    %14 = arith.addf %11, %13 : vector<64x128xf32>
    %cst_11 = arith.constant 0.000000e+00 : f32
    %15 = vector.broadcast %cst_11 : f32 to vector<64x128xf32>
    %16 = arith.maximumf %14, %15 : vector<64x128xf32>
    %17 = arith.truncf %16 : vector<64x128xf32> to vector<64x128xbf16>
    %c0_12 = arith.constant 0 : index
    %c0_13 = arith.constant 0 : index
    %18 = vector.load %arg6[%c0_12, %c0_13] : memref<128x128xbf16, #tpu.memory_space<vmem>>, vector<128x128xbf16>
    %cst_14 = arith.constant dense<0.000000e+00> : vector<64x128xf32>
    %19 = tpu.matmul %17, %18, %cst_14 {dimension_numbers = #tpu.dot_dimension_numbers<[1], [0], [0], [1], [0, 0, 1, 1], [], []>} : vector<64x128xbf16>, vector<128x128xbf16>, vector<64x128xf32> -> vector<64x128xf32>
    %c0_15 = arith.constant 0 : index
    %c0_16 = arith.constant 0 : index
    %20 = vector.load %arg7[%c0_15, %c0_16] : memref<1x128xf32, #tpu.memory_space<vmem>>, vector<1x128xf32>
    %21 = vector.broadcast %20 : vector<1x128xf32> to vector<64x128xf32>
    %22 = arith.addf %19, %21 : vector<64x128xf32>
    %cst_17 = arith.constant 0.000000e+00 : f32
    %23 = vector.broadcast %cst_17 : f32 to vector<64x128xf32>
    %24 = arith.maximumf %22, %23 : vector<64x128xf32>
    %25 = arith.truncf %24 : vector<64x128xf32> to vector<64x128xbf16>
    %c0_18 = arith.constant 0 : index
    %c0_19 = arith.constant 0 : index
    %26 = vector.load %arg8[%c0_18, %c0_19] : memref<128x128xbf16, #tpu.memory_space<vmem>>, vector<128x128xbf16>
    %cst_20 = arith.constant dense<0.000000e+00> : vector<64x128xf32>
    %27 = tpu.matmul %25, %26, %cst_20 {dimension_numbers = #tpu.dot_dimension_numbers<[1], [0], [0], [1], [0, 0, 1, 1], [], []>} : vector<64x128xbf16>, vector<128x128xbf16>, vector<64x128xf32> -> vector<64x128xf32>
    %c0_21 = arith.constant 0 : index
    %c0_22 = arith.constant 0 : index
    %28 = vector.load %arg9[%c0_21, %c0_22] : memref<1x128xf32, #tpu.memory_space<vmem>>, vector<1x128xf32>
    %29 = vector.broadcast %28 : vector<1x128xf32> to vector<64x128xf32>
    %30 = arith.addf %27, %29 : vector<64x128xf32>
    %31 = tpu.iota {dimensions = array<i32: 1>} : vector<64x128xi32>
    %c6_i32 = arith.constant 6 : i32
    %32 = vector.broadcast %c6_i32 : i32 to vector<64x128xi32>
    %33 = arith.cmpi slt, %31, %32 : vector<64x128xi32>
    %cst_23 = arith.constant 0xFF800000 : f32
    %34 = vector.broadcast %cst_23 : f32 to vector<64x128xf32>
    %35 = arith.select %33, %30, %34 : vector<64x128xi1>, vector<64x128xf32>
    %cst_24 = arith.constant dense<0xFF800000> : vector<64xf32>
    %36 = vector.multi_reduction <maximumf>, %35, %cst_24 [1] : vector<64x128xf32> to vector<64xf32>
    %37 = vector.shape_cast %36 : vector<64xf32> to vector<64x1xf32>
    %38 = vector.broadcast %37 : vector<64x1xf32> to vector<64x128xf32>
    %39 = arith.subf %35, %38 : vector<64x128xf32>
    %40 = math.exp %39 : vector<64x128xf32>
    %cst_25 = arith.constant dense<0.000000e+00> : vector<64xf32>
    %41 = vector.multi_reduction <add>, %40, %cst_25 [1] : vector<64x128xf32> to vector<64xf32>
    %42 = vector.shape_cast %41 : vector<64xf32> to vector<64x1xf32>
    %43 = tpu.reciprocal %42 {approx = true} : vector<64x1xf32> -> vector<64x1xf32>
    %44 = arith.mulf %42, %43 : vector<64x1xf32>
    %cst_26 = arith.constant 2.000000e+00 : f32
    %45 = vector.broadcast %cst_26 : f32 to vector<64x1xf32>
    %46 = arith.subf %45, %44 : vector<64x1xf32>
    %47 = arith.mulf %43, %46 : vector<64x1xf32>
    %48 = vector.broadcast %47 : vector<64x1xf32> to vector<64x128xf32>
    %49 = arith.mulf %40, %48 : vector<64x128xf32>
    %c64_i32 = arith.constant 64 : i32
    %50 = tpu.dynamic_rotate %49 by %c64_i32 dim 1 : vector<64x128xf32>, i32 -> vector<64x128xf32>
    %51 = arith.addf %30, %50 : vector<64x128xf32>
    %c0_27 = arith.constant 0 : index
    %c0_28 = arith.constant 0 : index
    %52 = vector.load %arg10[%c0_27, %c0_28] : memref<64x128xf32, #tpu.memory_space<vmem>>, vector<64x128xf32>
    tpu.vector_store %arg10[%c0_27, %c0_28], %51 {strides = array<i32>} : memref<64x128xf32, #tpu.memory_space<vmem>>, vector<64x128xf32>,
    return
  }
  func.func @transform_0(%arg0: i32) -> (i32, i32) {
    %c0_i32 = arith.constant 0 : i32
    %c0_i32_0 = arith.constant 0 : i32
    return %arg0, %c0_i32 : i32, i32
  }
  func.func @transform_1(%arg0: i32) -> (i32, i32) {
    %c0_i32 = arith.constant 0 : i32
    %c0_i32_0 = arith.constant 0 : i32
    %c0_i32_1 = arith.constant 0 : i32
    return %c0_i32, %c0_i32_0 : i32, i32
  }
  func.func @transform_2(%arg0: i32) -> (i32, i32) {
    %c0_i32 = arith.constant 0 : i32
    %c0_i32_0 = arith.constant 0 : i32
    %c0_i32_1 = arith.constant 0 : i32
    return %c0_i32, %c0_i32_0 : i32, i32
  }
  func.func @transform_3(%arg0: i32) -> (i32, i32) {
    %c0_i32 = arith.constant 0 : i32
    %c0_i32_0 = arith.constant 0 : i32
    %c0_i32_1 = arith.constant 0 : i32
    return %c0_i32, %c0_i32_0 : i32, i32
  }
  func.func @transform_4(%arg0: i32) -> (i32, i32) {
    %c0_i32 = arith.constant 0 : i32
    %c0_i32_0 = arith.constant 0 : i32
    %c0_i32_1 = arith.constant 0 : i32
    return %c0_i32, %c0_i32_0 : i32, i32
  }
  func.func @transform_5(%arg0: i32) -> (i32, i32) {
    %c0_i32 = arith.constant 0 : i32
    %c0_i32_0 = arith.constant 0 : i32
    %c0_i32_1 = arith.constant 0 : i32
    return %c0_i32, %c0_i32_0 : i32, i32
  }
  func.func @transform_6(%arg0: i32) -> (i32, i32) {
    %c0_i32 = arith.constant 0 : i32
    %c0_i32_0 = arith.constant 0 : i32
    %c0_i32_1 = arith.constant 0 : i32
    return %c0_i32, %c0_i32_0 : i32, i32
  }
  func.func @transform_7(%arg0: i32) -> (i32, i32) {
    %c0_i32 = arith.constant 0 : i32
    %c0_i32_0 = arith.constant 0 : i32
    %c0_i32_1 = arith.constant 0 : i32
    return %c0_i32, %c0_i32_0 : i32, i32
  }
  func.func @transform_8(%arg0: i32) -> (i32, i32) {
    %c0_i32 = arith.constant 0 : i32
    %c0_i32_0 = arith.constant 0 : i32
    %c0_i32_1 = arith.constant 0 : i32
    return %c0_i32, %c0_i32_0 : i32, i32
  }
  func.func @transform_9(%arg0: i32) -> (i32, i32) {
    %c0_i32 = arith.constant 0 : i32
    %c0_i32_0 = arith.constant 0 : i32
    return %arg0, %c0_i32 : i32, i32
  }
}

</mosaic_0001>

<llo_original>
// kernel: tpu_custom_call.1
$region0: #{tpu_custom_call.1}
  #allocation0 [shape = 'u32[]', space=smem, size = 0x4, offset = 0x4, fixed_abs, tag = 'smem constant byte address 0x4 - core index']
  #allocation1 [shape = 'u32[144,128]{1,0:T(1,128)}', space=vmem, size = 0x12000, scoped, tag = 'internal scratch']
  %s0 = inlined_call_operand.vmem [shape: f32[256,32], index: 0, kind: input, shape index: {}]
  %s1 = inlined_call_operand.vmem [shape: bf16[32,128], index: 1, kind: input, shape index: {}]
  %s2 = inlined_call_operand.vmem [shape: f32[1,128], index: 2, kind: input, shape index: {}]
  %s3 = inlined_call_operand.vmem [shape: bf16[128,128], index: 3, kind: input, shape index: {}]
  %s4 = inlined_call_operand.vmem [shape: f32[1,128], index: 4, kind: input, shape index: {}]
  %s5 = inlined_call_operand.vmem [shape: bf16[128,128], index: 5, kind: input, shape index: {}]
  %s6 = inlined_call_operand.vmem [shape: f32[1,128], index: 6, kind: input, shape index: {}]
  %s7 = inlined_call_operand.vmem [shape: bf16[128,128], index: 7, kind: input, shape index: {}]
  %s8 = inlined_call_operand.vmem [shape: f32[1,128], index: 8, kind: input, shape index: {}]
  %s9 = inlined_call_operand.hbm [shape: f32[256,128], index: 9, kind: output, shape index: {}]
  %s10 = sld [smem:[#allocation0]]
  $region69: #{tpu_custom_call.1} parent=0
    _
  %s12 = ssub.s32 1, %s10
  %s13 = scalar_select 0, %s12, %s10
  $region1: #{tpu_custom_call.1} parent=0
    #allocation2 [shape = 'u8[65536]{0}', space=vmem, size = 0x10000, scoped, tag = 'output window, operand 0']
    #allocation3 [shape = 's32[2]{0}', space=sflag, size = 0x8, scoped, tag = 'scoped memory for tpu_custom_call.1']
    %14 = vsyncpa [#allocation3], 0
    %s15 = scalar_lea.sflag [#allocation3], 1
    %16 = vsyncpa %s15, 0
    loop: start=0, step=1, limit=6
    $region2: #{tpu_custom_call.1} parent=1 // loop_pre_header
      _
    $region3: #{tpu_custom_call.1} parent=1 // loop_header
      %s18 = sphi 0, %s22
      %p19 = scmp.ge.s32.totalorder %s18, 6
      %s28 = sphi 0, %s30
      %s31 = sphi 0, %s28
      %s32 = sphi 0, %s31
      %s48 = sphi 0, %s32
      %s52 = sphi 0, %s52
      %s54 = sphi 0, %s52
      %s55 = sphi 0, %s54
      %s69 = sphi 0, %s55
      %s73 = sphi 0, %s73
      %s75 = sphi 0, %s73
      %s76 = sphi 0, %s75
      %s90 = sphi 0, %s76
      %s94 = sphi 0, %s94
      %s96 = sphi 0, %s94
      %s97 = sphi 0, %s96
      %s111 = sphi 0, %s97
      %s115 = sphi 0, %s115
      %s117 = sphi 0, %s115
      %s118 = sphi 0, %s117
      %s132 = sphi 0, %s118
      %s136 = sphi 0, %s136
      %s138 = sphi 0, %s136
      %s139 = sphi 0, %s138
      %s153 = sphi 0, %s139
      %s157 = sphi 0, %s157
      %s159 = sphi 0, %s157
      %s160 = sphi 0, %s159
      %s174 = sphi 0, %s160
      %s178 = sphi 0, %s178
      %s180 = sphi 0, %s178
      %s181 = sphi 0, %s180
      %s195 = sphi 0, %s181
      %s199 = sphi 0, %s199
      %s201 = sphi 0, %s199
      %s202 = sphi 0, %s201
      %s216 = sphi 0, %s202
      %s222 = sphi 0, %s224
      %s225 = sphi 0, %s222
      %s226 = sphi 0, %s225
      %s242 = sphi 0, %s226
    $region4: #{tpu_custom_call.1} parent=1 // loop_header_branch
      %21 = sbr.rel (%p19) target = $region8
    $region5: #{tpu_custom_call.1} parent=1 // loop_body
      %s23 = ssub.s32 %s18, 1
      %s24 = ssub.s32 %s18, 2
      %s25 = sadd.s32 %s18, 1
      %s26 = ssub.s32 %s18, %s25
      %p27 = scmp.eq.s32.totalorder %s26, 0
      %s29 = sadd.s32 %s28, 1
      %s30 = scalar_select %p27, %s28, %s29
      %p33 = pneg %p27
      %p34 = scmp.eq.s32.totalorder %s18, 3
      %p35 = por %p33, %p34
      %p36 = scmp.ne.s32.totalorder %s28, %s31
      %p37 = scmp.eq.s32.totalorder %s18, 0
      %p38 = por %p36, %p37
      %p39 = scmp.ne.s32.totalorder %s28, %s31
      %p40 = scmp.eq.s32.totalorder %s23, 3
      %p41 = por %p39, %p40
      %p42 = scmp.ne.s32.totalorder %s31, %s32
      %p43 = scmp.eq.s32.totalorder %s23, 0
      %p44 = por %p42, %p43
      %p45 = scmp.ne.s32.totalorder %s31, %s32
      %p46 = scmp.eq.s32.totalorder %s24, 3
      %p47 = por %p45, %p46
      %p49 = scmp.ne.s32.totalorder %s32, %s48
      %p50 = scmp.eq.s32.totalorder %s24, 0
      %p51 = por %p49, %p50
      %s53 = sadd.s32 %s52, 1
      %p56 = scmp.eq.s32.totalorder %s18, 3
      %p57 = scmp.ne.s32.totalorder %s52, %s54
      %p58 = scmp.eq.s32.totalorder %s18, 0
      %p59 = por %p57, %p58
      %p60 = scmp.ne.s32.totalorder %s52, %s54
      %p61 = scmp.eq.s32.totalorder %s23, 3
      %p62 = por %p60, %p61
      %p63 = scmp.ne.s32.totalorder %s54, %s55
      %p64 = scmp.eq.s32.totalorder %s23, 0
      %p65 = por %p63, %p64
      %p66 = scmp.ne.s32.totalorder %s54, %s55
      %p67 = scmp.eq.s32.totalorder %s24, 3
      %p68 = por %p66, %p67
      %p70 = scmp.ne.s32.totalorder %s55, %s69
      %p71 = scmp.eq.s32.totalorder %s24, 0
      %p72 = por %p70, %p71
      %s74 = sadd.s32 %s73, 1
      %p77 = scmp.eq.s32.totalorder %s18, 3
      %p78 = scmp.ne.s32.totalorder %s73, %s75
      %p79 = scmp.eq.s32.totalorder %s18, 0
      %p80 = por %p78, %p79
      %p81 = scmp.ne.s32.totalorder %s73, %s75
      %p82 = scmp.eq.s32.totalorder %s23, 3
      %p83 = por %p81, %p82
      %p84 = scmp.ne.s32.totalorder %s75, %s76
      %p85 = scmp.eq.s32.totalorder %s23, 0
      %p86 = por %p84, %p85
      %p87 = scmp.ne.s32.totalorder %s75, %s76
      %p88 = scmp.eq.s32.totalorder %s24, 3
      %p89 = por %p87, %p88
      %p91 = scmp.ne.s32.totalorder %s76, %s90
      %p92 = scmp.eq.s32.totalorder %s24, 0
      %p93 = por %p91, %p92
      %s95 = sadd.s32 %s94, 1
      %p98 = scmp.eq.s32.totalorder %s18, 3
      %p99 = scmp.ne.s32.totalorder %s94, %s96
      %p100 = scmp.eq.s32.totalorder %s18, 0
      %p101 = por %p99, %p100
      %p102 = scmp.ne.s32.totalorder %s94, %s96
      %p103 = scmp.eq.s32.totalorder %s23, 3
      %p104 = por %p102, %p103
      %p105 = scmp.ne.s32.totalorder %s96, %s97
      %p106 = scmp.eq.s32.totalorder %s23, 0
      %p107 = por %p105, %p106
      %p108 = scmp.ne.s32.totalorder %s96, %s97
      %p109 = scmp.eq.s32.totalorder %s24, 3
      %p110 = por %p108, %p109
      %p112 = scmp.ne.s32.totalorder %s97, %s111
      %p113 = scmp.eq.s32.totalorder %s24, 0
      %p114 = por %p112, %p113
      %s116 = sadd.s32 %s115, 1
      %p119 = scmp.eq.s32.totalorder %s18, 3
      %p120 = scmp.ne.s32.totalorder %s115, %s117
      %p121 = scmp.eq.s32.totalorder %s18, 0
      %p122 = por %p120, %p121
      %p123 = scmp.ne.s32.totalorder %s115, %s117
      %p124 = scmp.eq.s32.totalorder %s23, 3
      %p125 = por %p123, %p124
      %p126 = scmp.ne.s32.totalorder %s117, %s118
      %p127 = scmp.eq.s32.totalorder %s23, 0
      %p128 = por %p126, %p127
      %p129 = scmp.ne.s32.totalorder %s117, %s118
      %p130 = scmp.eq.s32.totalorder %s24, 3
      %p131 = por %p129, %p130
      %p133 = scmp.ne.s32.totalorder %s118, %s132
      %p134 = scmp.eq.s32.totalorder %s24, 0
      %p135 = por %p133, %p134
      %s137 = sadd.s32 %s136, 1
      %p140 = scmp.eq.s32.totalorder %s18, 3
      %p141 = scmp.ne.s32.totalorder %s136, %s138
      %p142 = scmp.eq.s32.totalorder %s18, 0
      %p143 = por %p141, %p142
      %p144 = scmp.ne.s32.totalorder %s136, %s138
      %p145 = scmp.eq.s32.totalorder %s23, 3
      %p146 = por %p144, %p145
      %p147 = scmp.ne.s32.totalorder %s138, %s139
      %p148 = scmp.eq.s32.totalorder %s23, 0
      %p149 = por %p147, %p148
      %p150 = scmp.ne.s32.totalorder %s138, %s139
      %p151 = scmp.eq.s32.totalorder %s24, 3
      %p152 = por %p150, %p151
      %p154 = scmp.ne.s32.totalorder %s139, %s153
      %p155 = scmp.eq.s32.totalorder %s24, 0
      %p156 = por %p154, %p155
      %s158 = sadd.s32 %s157, 1
      %p161 = scmp.eq.s32.totalorder %s18, 3
      %p162 = scmp.ne.s32.totalorder %s157, %s159
      %p163 = scmp.eq.s32.totalorder %s18, 0
      %p164 = por %p162, %p163
      %p165 = scmp.ne.s32.totalorder %s157, %s159
      %p166 = scmp.eq.s32.totalorder %s23, 3
      %p167 = por %p165, %p166
      %p168 = scmp.ne.s32.totalorder %s159, %s160
      %p169 = scmp.eq.s32.totalorder %s23, 0
      %p170 = por %p168, %p169
      %p171 = scmp.ne.s32.totalorder %s159, %s160
      %p172 = scmp.eq.s32.totalorder %s24, 3
      %p173 = por %p171, %p172
      %p175 = scmp.ne.s32.totalorder %s160, %s174
      %p176 = scmp.eq.s32.totalorder %s24, 0
      %p177 = por %p175, %p176
      %s179 = sadd.s32 %s178, 1
      %p182 = scmp.eq.s32.totalorder %s18, 3
      %p183 = scmp.ne.s32.totalorder %s178, %s180
      %p184 = scmp.eq.s32.totalorder %s18, 0
      %p185 = por %p183, %p184
      %p186 = scmp.ne.s32.totalorder %s178, %s180
      %p187 = scmp.eq.s32.totalorder %s23, 3
      %p188 = por %p186, %p187
      %p189 = scmp.ne.s32.totalorder %s180, %s181
      %p190 = scmp.eq.s32.totalorder %s23, 0
      %p191 = por %p189, %p190
      %p192 = scmp.ne.s32.totalorder %s180, %s181
      %p193 = scmp.eq.s32.totalorder %s24, 3
      %p194 = por %p192, %p193
      %p196 = scmp.ne.s32.totalorder %s181, %s195
      %p197 = scmp.eq.s32.totalorder %s24, 0
      %p198 = por %p196, %p197
      %s200 = sadd.s32 %s199, 1
      %p203 = scmp.eq.s32.totalorder %s18, 3
      %p204 = scmp.ne.s32.totalorder %s199, %s201
      %p205 = scmp.eq.s32.totalorder %s18, 0
      %p206 = por %p204, %p205
      %p207 = scmp.ne.s32.totalorder %s199, %s201
      %p208 = scmp.eq.s32.totalorder %s23, 3
      %p209 = por %p207, %p208
      %p210 = scmp.ne.s32.totalorder %s201, %s202
      %p211 = scmp.eq.s32.totalorder %s23, 0
      %p212 = por %p210, %p211
      %p213 = scmp.ne.s32.totalorder %s201, %s202
      %p214 = scmp.eq.s32.totalorder %s24, 3
      %p215 = por %p213, %p214
      %p217 = scmp.ne.s32.totalorder %s202, %s216
      %p218 = scmp.eq.s32.totalorder %s24, 0
      %p219 = por %p217, %p218
      %s220 = ssub.s32 %s18, %s25
      %p221 = scmp.eq.s32.totalorder %s220, 0
      %s223 = sadd.s32 %s222, 1
      %s224 = scalar_select %p221, %s222, %s223
      %p227 = pneg %p221
      %p228 = scmp.eq.s32.totalorder %s18, 3
      %p229 = por %p227, %p228
      %p230 = scmp.ne.s32.totalorder %s222, %s225
      %p231 = scmp.eq.s32.totalorder %s18, 0
      %p232 = por %p230, %p231
      %p233 = scmp.ne.s32.totalorder %s222, %s225
      %p234 = scmp.eq.s32.totalorder %s23, 3
      %p235 = por %p233, %p234
      %p236 = scmp.ne.s32.totalorder %s225, %s226
      %p237 = scmp.eq.s32.totalorder %s23, 0
      %p238 = por %p236, %p237
      %p239 = scmp.ne.s32.totalorder %s225, %s226
      %p240 = scmp.eq.s32.totalorder %s24, 3
      %p241 = por %p239, %p240
      %p243 = scmp.ne.s32.totalorder %s226, %s242
      %p244 = scmp.eq.s32.totalorder %s24, 0
      %p245 = por %p243, %p244
      %p246 = scmp.le.s32.totalorder 1, %s18
      %p247 = scmp.lt.s32.totalorder %s18, 5
      %p248 = pnand %p246, %p247
      %p249 = pneg %p248
      // Predicated region
      $region9: #{tpu_custom_call.1} parent=5 // pred_check
        _
      $region10: #{tpu_custom_call.1} parent=5 // pred_check_branch
        %251 = sbr.rel (%p248) target = $region12
      $region11: #{tpu_custom_call.1} parent=5 // pred_region
        %s252 = ssub.s32 %s18, 1
        // Predicated region
        $region13: #{tpu_custom_call.1} parent=11 // pred_check
          %p253 = pneg %p65
        $region14: #{tpu_custom_call.1} parent=11 // pred_check_branch
          %255 = sbr.rel (%p253) target = $region16
        $region15: #{tpu_custom_call.1} parent=11 // pred_region
          _
        $region16: #{tpu_custom_call.1} parent=11 // pred_fallthru
          _
        // Predicated region
        $region17: #{tpu_custom_call.1} parent=11 // pred_check
          %p256 = pneg %p86
        $region18: #{tpu_custom_call.1} parent=11 // pred_check_branch
          %258 = sbr.rel (%p256) target = $region20
        $region19: #{tpu_custom_call.1} parent=11 // pred_region
          _
        $region20: #{tpu_custom_call.1} parent=11 // pred_fallthru
          _
        // Predicated region
        $region21: #{tpu_custom_call.1} parent=11 // pred_check
          %p259 = pneg %p107
        $region22: #{tpu_custom_call.1} parent=11 // pred_check_branch
          %261 = sbr.rel (%p259) target = $region24
        $region23: #{tpu_custom_call.1} parent=11 // pred_region
          _
        $region24: #{tpu_custom_call.1} parent=11 // pred_fallthru
          _
        // Predicated region
        $region25: #{tpu_custom_call.1} parent=11 // pred_check
          %p262 = pneg %p128
        $region26: #{tpu_custom_call.1} parent=11 // pred_check_branch
          %264 = sbr.rel (%p262) target = $region28
        $region27: #{tpu_custom_call.1} parent=11 // pred_region
          _
        $region28: #{tpu_custom_call.1} parent=11 // pred_fallthru
          _
        // Predicated region
        $region29: #{tpu_custom_call.1} parent=11 // pred_check
          %p265 = pneg %p149
        $region30: #{tpu_custom_call.1} parent=11 // pred_check_branch
          %267 = sbr.rel (%p265) target = $region32
        $region31: #{tpu_custom_call.1} parent=11 // pred_region
          _
        $region32: #{tpu_custom_call.1} parent=11 // pred_fallthru
          _
        // Predicated region
        $region33: #{tpu_custom_call.1} parent=11 // pred_check
          %p268 = pneg %p170
        $region34: #{tpu_custom_call.1} parent=11 // pred_check_branch
          %270 = sbr.rel (%p268) target = $region36
        $region35: #{tpu_custom_call.1} parent=11 // pred_region
          _
        $region36: #{tpu_custom_call.1} parent=11 // pred_fallthru
          _
        // Predicated region
        $region37: #{tpu_custom_call.1} parent=11 // pred_check
          %p271 = pneg %p191
        $region38: #{tpu_custom_call.1} parent=11 // pred_check_branch
          %273 = sbr.rel (%p271) target = $region40
        $region39: #{tpu_custom_call.1} parent=11 // pred_region
          _
        $region40: #{tpu_custom_call.1} parent=11 // pred_fallthru
          _
        // Predicated region
        $region41: #{tpu_custom_call.1} parent=11 // pred_check
          %p274 = pneg %p212
        $region42: #{tpu_custom_call.1} parent=11 // pred_check_branch
          %276 = sbr.rel (%p274) target = $region44
        $region43: #{tpu_custom_call.1} parent=11 // pred_region
          _
        $region44: #{tpu_custom_call.1} parent=11 // pred_fallthru
          _
      $region12: #{tpu_custom_call.1} parent=5 // pred_fallthru
        _
      %p277 = scmp.lt.s32.totalorder %s18, 4
      // Predicated region
      $region45: #{tpu_custom_call.1} parent=5 // pred_check
        %p278 = pneg %p277
      $region46: #{tpu_custom_call.1} parent=5 // pred_check_branch
        %280 = sbr.rel (%p278) target = $region48
      $region47: #{tpu_custom_call.1} parent=5 // pred_region
        // Predicated region
        $region49: #{tpu_custom_call.1} parent=47 // pred_check
          %p281 = pneg %p38
        $region50: #{tpu_custom_call.1} parent=47 // pred_check_branch
          %283 = sbr.rel (%p281) target = $region52
        $region51: #{tpu_custom_call.1} parent=47 // pred_region
          %s284 = smul.u32 8, %s18
          %p285 = scmp.lt.s32.totalorder %s284, 31
          %s286 = scalar_select %p285, %s284, 31
          %s287 = smul.addr %s286, 8
          %s288 = scalar_lea.vmem %s0, %s287
          %s289 = smul.u32 8, %s18
        $region52: #{tpu_custom_call.1} parent=47 // pred_fallthru
          _
      $region48: #{tpu_custom_call.1} parent=5 // pred_fallthru
        _
      %p290 = scmp.le.s32.totalorder 1, %s18
      %p291 = scmp.lt.s32.totalorder %s18, 5
      %p292 = pnand %p290, %p291
      %p293 = pneg %p292
      // Predicated region
      $region53: #{tpu_custom_call.1} parent=5 // pred_check
        _
      $region54: #{tpu_custom_call.1} parent=5 // pred_check_branch
        %295 = sbr.rel (%p292) target = $region56
      $region55: #{tpu_custom_call.1} parent=5 // pred_region
        %s296 = ssub.s32 %s18, 1
        %s297 = smul.u32 8, %s23
        %p298 = scmp.lt.s32.totalorder %s297, 31
        %s299 = scalar_select %p298, %s297, 31
        %s300 = smul.addr %s299, 8
        %s301 = scalar_lea.vmem %s0, %s300
        %p302 = pneg %p44
        %p303 = pneg %p41
        %p304 = pneg %p65
        %p305 = pneg %p62
        %p306 = pneg %p86
        %p307 = pneg %p83
        %p308 = pneg %p107
        %p309 = pneg %p104
        %p310 = pneg %p128
        %p311 = pneg %p125
        %p312 = pneg %p149
        %p313 = pneg %p146
        %p314 = pneg %p170
        %p315 = pneg %p167
        %p316 = pneg %p191
        %p317 = pneg %p188
        %p318 = pneg %p212
        %p319 = pneg %p209
        %p320 = pneg %p238
        %p321 = pneg %p235
        %s322 = sand.u32 %s225, 1
        %s323 = scalar_lea.sflag [#allocation3], %s322
        %s324 = sand.u32 %s225, 1
        %s325 = smul.addr %s324, 64
        %s326 = scalar_lea.vmem [#allocation2], %s325
        %s327 = smul.u32 8, %s23
        %p328 = scmp.lt.s32.totalorder %s327, 31
        %s329 = scalar_select %p328, %s327, 31
        %s330 = smul.addr %s329, 8
        %s331 = scalar_lea.vmem %s0, %s330
        %s332 = smul.u32 8, %s23
        %s333 = smul.u32 8, %s23
        %v335 = vld [vmem:[%s331] sm:$0xff]
        %v336 = vld [vmem:[%s331 + $0x8] sm:$0xff]
        %v337 = vld [vmem:[%s331 + $0x10] sm:$0xff]
        %v338 = vld [vmem:[%s331 + $0x18] sm:$0xff]
        %v339 = vld [vmem:[%s331 + $0x20] sm:$0xff]
        %v340 = vld [vmem:[%s331 + $0x28] sm:$0xff]
        %v341 = vld [vmem:[%s331 + $0x30] sm:$0xff]
        %v342 = vld [vmem:[%s331 + $0x38] sm:$0xff]
        %v343 = vpack.c.bf16 %v336, %v335
        %v344 = vpack.c.bf16 %v338, %v337
        %v345 = vpack.c.bf16 %v340, %v339
        %v346 = vpack.c.bf16 %v342, %v341
        %v347 = vld [vmem:[%s1] sm:$0xf]
        %v348 = vld [vmem:[%s1 + $0x4] sm:$0xf]
        %v349 = vld [vmem:[%s1 + $0x8] sm:$0xf]
        %v350 = vld [vmem:[%s1 + $0xc] sm:$0xf]
        %v351 = vld [vmem:[%s2] sm:$0x1]
        %v353 = vlaneseq
        %v354 = vshrl.u32 %v353, 7
        %v355 = vsub.s32 0, %v354
        %v356 = vrot.slane %v351, %v355
        %v362 = vunpack.c.l.b16 %v347
        %v363 = vunpack.c.l.b16 %v348
        %v364 = vunpack.c.l.b16 %v349
        %v365 = vunpack.c.l.b16 %v350
        %v366 = vpack.c.b16 %v363, %v362
        %v367 = vpack.c.b16 %v365, %v364
        %vm370 = vcmask 261120
        %v372 = vsel %vm370, %v343, 0
        %v375 = vsel %vm370, %v344, 0
        %v378 = vsel %vm370, %v345, 0
        %v381 = vsel %vm370, %v346, 0
        %383 = vmatprep.subr.bf16.mxu0 0
        %384 = vmatpush1.bf16.msra.mxu0 %v366
        %385 = vmatprep.subr.bf16.mxu0 0
        %386 = vmatpush1.bf16.msra.mxu0 %v367
        %387 = vmatprep.subr.bf16.mxu0 0
        %388 = vmatpush1.bf16.msra.mxu0 0
        %389 = vmatprep.subr.bf16.mxu0 0
        %390 = vmatpush1.bf16.msra.mxu0 0
        %391 = vmatprep.subr.bf16.mxu0 0
        %392 = vmatpush1.bf16.msra.mxu0 0
        %393 = vmatprep.subr.bf16.mxu0 0
        %394 = vmatpush1.bf16.msra.mxu0 0
        %395 = vmatprep.subr.bf16.mxu0 0
        %396 = vmatpush1.bf16.msra.mxu0 0
        %397 = vmatprep.subr.bf16.mxu0 0
        %398 = vmatpush1.bf16.msra.mxu0 0
        %399 = vmatprep.subr.bf16.mxu0 0
        %400 = vmatpush1.bf16.msra.mxu0 0
        %401 = vmatprep.subr.bf16.mxu0 0
        %402 = vmatpush1.bf16.msra.mxu0 0
        %403 = vmatprep.subr.bf16.mxu0 0
        %404 = vmatpush1.bf16.msra.mxu0 0
        %405 = vmatprep.subr.bf16.mxu0 0
        %406 = vmatpush1.bf16.msra.mxu0 0
        %407 = vmatprep.subr.bf16.mxu0 0
        %408 = vmatpush1.bf16.msra.mxu0 0
        %409 = vmatprep.subr.bf16.mxu0 0
        %410 = vmatpush1.bf16.msra.mxu0 0
        %411 = vmatprep.subr.bf16.mxu0 0
        %412 = vmatpush1.bf16.msra.mxu0 0
        %413 = vmatprep.subr.bf16.mxu0 0
        %414 = vmatpush1.bf16.msra.mxu0 0
        %415 = vmatprep.mubr.bf16.mxu0 0
        %416 = vmatmul.mubr.bf16.gmra.mrb[0].mxu0 %v372
        %v417 = vpop.f32.mrb[0].mxu0
        %v418 = vadd.f32 %v356, %v417
        %v419 = vpop.f32.mrb[0].mxu0
        %v420 = vpop.f32.mrb[0].mxu0
        %v421 = vadd.f32 %v356, %v420
        %v422 = vpop.f32.mrb[0].mxu0
        %423 = vmatprep.mubr.bf16.mxu0 0
        %424 = vmatmul.mubr.bf16.gmra.mrb[0].mxu0 %v375
        %v425 = vpop.f32.mrb[0].mxu0
        %v426 = vadd.f32 %v356, %v425
        %v427 = vpop.f32.mrb[0].mxu0
        %v428 = vpop.f32.mrb[0].mxu0
        %v429 = vadd.f32 %v356, %v428
        %v430 = vpop.f32.mrb[0].mxu0
        %431 = vmatprep.mubr.bf16.mxu0 0
        %432 = vmatmul.mubr.bf16.gmra.mrb[0].mxu0 %v378
        %v433 = vpop.f32.mrb[0].mxu0
        %v434 = vadd.f32 %v356, %v433
        %v435 = vpop.f32.mrb[0].mxu0
        %v436 = vpop.f32.mrb[0].mxu0
        %v437 = vadd.f32 %v356, %v436
        %v438 = vpop.f32.mrb[0].mxu0
        %439 = vmatprep.mubr.bf16.mxu0 0
        %440 = vmatmul.mubr.bf16.gmra.mrb[0].mxu0 %v381
        %v441 = vpop.f32.mrb[0].mxu0
        %v442 = vadd.f32 %v356, %v441
        %v443 = vpop.f32.mrb[0].mxu0
        %v444 = vpop.f32.mrb[0].mxu0
        %v445 = vadd.f32 %v356, %v444
        %v446 = vpop.f32.mrb[0].mxu0
        %447 = vdwg.mxu0
        %v448 = vmax.f32 %v418, 0.0
        %v449 = vmax.f32 %v421, 0.0
        %v450 = vmax.f32 %v426, 0.0
        %v451 = vmax.f32 %v429, 0.0
        %v452 = vmax.f32 %v434, 0.0
        %v453 = vmax.f32 %v437, 0.0
        %v454 = vmax.f32 %v442, 0.0
        %v455 = vmax.f32 %v445, 0.0
        %v456 = vpack.c.bf16 %v449, %v448
        %v457 = vpack.c.bf16 %v451, %v450
        %v458 = vpack.c.bf16 %v453, %v452
        %v459 = vpack.c.bf16 %v455, %v454
        %v460 = vld [vmem:[%s3] sm:$0xf]
        %v461 = vld [vmem:[%s3 + $0x4] sm:$0xf]
        %v462 = vld [vmem:[%s3 + $0x8] sm:$0xf]
        %v463 = vld [vmem:[%s3 + $0xc] sm:$0xf]
        %v464 = vld [vmem:[%s3 + $0x10] sm:$0xf]
        %v465 = vld [vmem:[%s3 + $0x14] sm:$0xf]
        %v466 = vld [vmem:[%s3 + $0x18] sm:$0xf]
        %v467 = vld [vmem:[%s3 + $0x1c] sm:$0xf]
        %v468 = vld [vmem:[%s3 + $0x20] sm:$0xf]
        %v469 = vld [vmem:[%s3 + $0x24] sm:$0xf]
        %v470 = vld [vmem:[%s3 + $0x28] sm:$0xf]
        %v471 = vld [vmem:[%s3 + $0x2c] sm:$0xf]
        %v472 = vld [vmem:[%s3 + $0x30] sm:$0xf]
        %v473 = vld [vmem:[%s3 + $0x34] sm:$0xf]
        %v474 = vld [vmem:[%s3 + $0x38] sm:$0xf]
        %v475 = vld [vmem:[%s3 + $0x3c] sm:$0xf]
        %v476 = vld [vmem:[%s4] sm:$0x1]
        %v478 = vlaneseq
        %v479 = vshrl.u32 %v478, 7
        %v480 = vsub.s32 0, %v479
        %v481 = vrot.slane %v476, %v480
        %v499 = vunpack.c.l.b16 %v460
        %v500 = vunpack.c.l.b16 %v461
        %v501 = vunpack.c.l.b16 %v462
        %v502 = vunpack.c.l.b16 %v463
        %v503 = vunpack.c.l.b16 %v464
        %v504 = vunpack.c.l.b16 %v465
        %v505 = vunpack.c.l.b16 %v466
        %v506 = vunpack.c.l.b16 %v467
        %v507 = vunpack.c.l.b16 %v468
        %v508 = vunpack.c.l.b16 %v469
        %v509 = vunpack.c.l.b16 %v470
        %v510 = vunpack.c.l.b16 %v471
        %v511 = vunpack.c.l.b16 %v472
        %v512 = vunpack.c.l.b16 %v473
        %v513 = vunpack.c.l.b16 %v474
        %v514 = vunpack.c.l.b16 %v475
        %v515 = vpack.c.b16 %v500, %v499
        %v516 = vpack.c.b16 %v502, %v501
        %v517 = vpack.c.b16 %v504, %v503
        %v518 = vpack.c.b16 %v506, %v505
        %v519 = vpack.c.b16 %v508, %v507
        %v520 = vpack.c.b16 %v510, %v509
        %v521 = vpack.c.b16 %v512, %v511
        %v522 = vpack.c.b16 %v514, %v513
        %531 = vmatprep.subr.bf16.mxu0 0
        %532 = vmatpush1.bf16.msra.mxu0 %v515
        %533 = vmatprep.subr.bf16.mxu0 0
        %534 = vmatpush1.bf16.msra.mxu0 %v516
        %535 = vmatprep.subr.bf16.mxu0 0
        %536 = vmatpush1.bf16.msra.mxu0 %v517
        %537 = vmatprep.subr.bf16.mxu0 0
        %538 = vmatpush1.bf16.msra.mxu0 %v518
        %539 = vmatprep.subr.bf16.mxu0 0
        %540 = vmatpush1.bf16.msra.mxu0 %v519
        %541 = vmatprep.subr.bf16.mxu0 0
        %542 = vmatpush1.bf16.msra.mxu0 %v520
        %543 = vmatprep.subr.bf16.mxu0 0
        %544 = vmatpush1.bf16.msra.mxu0 %v521
        %545 = vmatprep.subr.bf16.mxu0 0
        %546 = vmatpush1.bf16.msra.mxu0 %v522
        %547 = vmatprep.subr.bf16.mxu0 0
        %548 = vmatpush1.bf16.msra.mxu0 0
        %549 = vmatprep.subr.bf16.mxu0 0
        %550 = vmatpush1.bf16.msra.mxu0 0
        %551 = vmatprep.subr.bf16.mxu0 0
        %552 = vmatpush1.bf16.msra.mxu0 0
        %553 = vmatprep.subr.bf16.mxu0 0
        %554 = vmatpush1.bf16.msra.mxu0 0
        %555 = vmatprep.subr.bf16.mxu0 0
        %556 = vmatpush1.bf16.msra.mxu0 0
        %557 = vmatprep.subr.bf16.mxu0 0
        %558 = vmatpush1.bf16.msra.mxu0 0
        %559 = vmatprep.subr.bf16.mxu0 0
        %560 = vmatpush1.bf16.msra.mxu0 0
        %561 = vmatprep.subr.bf16.mxu0 0
        %562 = vmatpush1.bf16.msra.mxu0 0
        %563 = vmatprep.mubr.bf16.mxu0 0
        %564 = vmatmul.mubr.bf16.gmra.mrb[0].mxu0 %v456
        %v565 = vpop.f32.mrb[0].mxu0
        %v566 = vadd.f32 %v481, %v565
        %v567 = vpop.f32.mrb[0].mxu0
        %v568 = vpop.f32.mrb[0].mxu0
        %v569 = vadd.f32 %v481, %v568
        %v570 = vpop.f32.mrb[0].mxu0
        %571 = vmatprep.mubr.bf16.mxu0 0
        %572 = vmatmul.mubr.bf16.gmra.mrb[0].mxu0 %v457
        %v573 = vpop.f32.mrb[0].mxu0
        %v574 = vadd.f32 %v481, %v573
        %v575 = vpop.f32.mrb[0].mxu0
        %v576 = vpop.f32.mrb[0].mxu0
        %v577 = vadd.f32 %v481, %v576
        %v578 = vpop.f32.mrb[0].mxu0
        %579 = vmatprep.mubr.bf16.mxu0 0
        %580 = vmatmul.mubr.bf16.gmra.mrb[0].mxu0 %v458
        %v581 = vpop.f32.mrb[0].mxu0
        %v582 = vadd.f32 %v481, %v581
        %v583 = vpop.f32.mrb[0].mxu0
        %v584 = vpop.f32.mrb[0].mxu0
        %v585 = vadd.f32 %v481, %v584
        %v586 = vpop.f32.mrb[0].mxu0
        %587 = vmatprep.mubr.bf16.mxu0 0
        %588 = vmatmul.mubr.bf16.gmra.mrb[0].mxu0 %v459
        %v589 = vpop.f32.mrb[0].mxu0
        %v590 = vadd.f32 %v481, %v589
        %v591 = vpop.f32.mrb[0].mxu0
        %v592 = vpop.f32.mrb[0].mxu0
        %v593 = vadd.f32 %v481, %v592
        %v594 = vpop.f32.mrb[0].mxu0
        %595 = vdwg.mxu0
        %v596 = vmax.f32 %v566, 0.0
        %v597 = vmax.f32 %v569, 0.0
        %v598 = vmax.f32 %v574, 0.0
        %v599 = vmax.f32 %v577, 0.0
        %v600 = vmax.f32 %v582, 0.0
        %v601 = vmax.f32 %v585, 0.0
        %v602 = vmax.f32 %v590, 0.0
        %v603 = vmax.f32 %v593, 0.0
        %v604 = vpack.c.bf16 %v597, %v596
        %v605 = vpack.c.bf16 %v599, %v598
        %v606 = vpack.c.bf16 %v601, %v600
        %v607 = vpack.c.bf16 %v603, %v602
        %v608 = vld [vmem:[%s5] sm:$0xf]
        %v609 = vld [vmem:[%s5 + $0x4] sm:$0xf]
        %v610 = vld [vmem:[%s5 + $0x8] sm:$0xf]
        %v611 = vld [vmem:[%s5 + $0xc] sm:$0xf]
        %v612 = vld [vmem:[%s5 + $0x10] sm:$0xf]
        %v613 = vld [vmem:[%s5 + $0x14] sm:$0xf]
        %v614 = vld [vmem:[%s5 + $0x18] sm:$0xf]
        %v615 = vld [vmem:[%s5 + $0x1c] sm:$0xf]
        %v616 = vld [vmem:[%s5 + $0x20] sm:$0xf]
        %v617 = vld [vmem:[%s5 + $0x24] sm:$0xf]
        %v618 = vld [vmem:[%s5 + $0x28] sm:$0xf]
        %v619 = vld [vmem:[%s5 + $0x2c] sm:$0xf]
        %v620 = vld [vmem:[%s5 + $0x30] sm:$0xf]
        %v621 = vld [vmem:[%s5 + $0x34] sm:$0xf]
        %v622 = vld [vmem:[%s5 + $0x38] sm:$0xf]
        %v623 = vld [vmem:[%s5 + $0x3c] sm:$0xf]
        %v624 = vld [vmem:[%s6] sm:$0x1]
        %v626 = vlaneseq
        %v627 = vshrl.u32 %v626, 7
        %v628 = vsub.s32 0, %v627
        %v629 = vrot.slane %v624, %v628
        %v647 = vunpack.c.l.b16 %v608
        %v648 = vunpack.c.l.b16 %v609
        %v649 = vunpack.c.l.b16 %v610
        %v650 = vunpack.c.l.b16 %v611
        %v651 = vunpack.c.l.b16 %v612
        %v652 = vunpack.c.l.b16 %v613
        %v653 = vunpack.c.l.b16 %v614
        %v654 = vunpack.c.l.b16 %v615
        %v655 = vunpack.c.l.b16 %v616
        %v656 = vunpack.c.l.b16 %v617
        %v657 = vunpack.c.l.b16 %v618
        %v658 = vunpack.c.l.b16 %v619
        %v659 = vunpack.c.l.b16 %v620
        %v660 = vunpack.c.l.b16 %v621
        %v661 = vunpack.c.l.b16 %v622
        %v662 = vunpack.c.l.b16 %v623
        %v663 = vpack.c.b16 %v648, %v647
        %v664 = vpack.c.b16 %v650, %v649
        %v665 = vpack.c.b16 %v652, %v651
        %v666 = vpack.c.b16 %v654, %v653
        %v667 = vpack.c.b16 %v656, %v655
        %v668 = vpack.c.b16 %v658, %v657
        %v669 = vpack.c.b16 %v660, %v659
        %v670 = vpack.c.b16 %v662, %v661
        %679 = vmatprep.subr.bf16.mxu0 0
        %680 = vmatpush1.bf16.msra.mxu0 %v663
        %681 = vmatprep.subr.bf16.mxu0 0
        %682 = vmatpush1.bf16.msra.mxu0 %v664
        %683 = vmatprep.subr.bf16.mxu0 0
        %684 = vmatpush1.bf16.msra.mxu0 %v665
        %685 = vmatprep.subr.bf16.mxu0 0
        %686 = vmatpush1.bf16.msra.mxu0 %v666
        %687 = vmatprep.subr.bf16.mxu0 0
        %688 = vmatpush1.bf16.msra.mxu0 %v667
        %689 = vmatprep.subr.bf16.mxu0 0
        %690 = vmatpush1.bf16.msra.mxu0 %v668
        %691 = vmatprep.subr.bf16.mxu0 0
        %692 = vmatpush1.bf16.msra.mxu0 %v669
        %693 = vmatprep.subr.bf16.mxu0 0
        %694 = vmatpush1.bf16.msra.mxu0 %v670
        %695 = vmatprep.subr.bf16.mxu0 0
        %696 = vmatpush1.bf16.msra.mxu0 0
        %697 = vmatprep.subr.bf16.mxu0 0
        %698 = vmatpush1.bf16.msra.mxu0 0
        %699 = vmatprep.subr.bf16.mxu0 0
        %700 = vmatpush1.bf16.msra.mxu0 0
        %701 = vmatprep.subr.bf16.mxu0 0
        %702 = vmatpush1.bf16.msra.mxu0 0
        %703 = vmatprep.subr.bf16.mxu0 0
        %704 = vmatpush1.bf16.msra.mxu0 0
        %705 = vmatprep.subr.bf16.mxu0 0
        %706 = vmatpush1.bf16.msra.mxu0 0
        %707 = vmatprep.subr.bf16.mxu0 0
        %708 = vmatpush1.bf16.msra.mxu0 0
        %709 = vmatprep.subr.bf16.mxu0 0
        %710 = vmatpush1.bf16.msra.mxu0 0
        %711 = vmatprep.mubr.bf16.mxu0 0
        %712 = vmatmul.mubr.bf16.gmra.mrb[0].mxu0 %v604
        %v713 = vpop.f32.mrb[0].mxu0
        %v714 = vadd.f32 %v629, %v713
        %v715 = vpop.f32.mrb[0].mxu0
        %v716 = vpop.f32.mrb[0].mxu0
        %v717 = vadd.f32 %v629, %v716
        %v718 = vpop.f32.mrb[0].mxu0
        %719 = vmatprep.mubr.bf16.mxu0 0
        %720 = vmatmul.mubr.bf16.gmra.mrb[0].mxu0 %v605
        %v721 = vpop.f32.mrb[0].mxu0
        %v722 = vadd.f32 %v629, %v721
        %v723 = vpop.f32.mrb[0].mxu0
        %v724 = vpop.f32.mrb[0].mxu0
        %v725 = vadd.f32 %v629, %v724
        %v726 = vpop.f32.mrb[0].mxu0
        %727 = vmatprep.mubr.bf16.mxu0 0
        %728 = vmatmul.mubr.bf16.gmra.mrb[0].mxu0 %v606
        %v729 = vpop.f32.mrb[0].mxu0
        %v730 = vadd.f32 %v629, %v729
        %v731 = vpop.f32.mrb[0].mxu0
        %v732 = vpop.f32.mrb[0].mxu0
        %v733 = vadd.f32 %v629, %v732
        %v734 = vpop.f32.mrb[0].mxu0
        %735 = vmatprep.mubr.bf16.mxu0 0
        %736 = vmatmul.mubr.bf16.gmra.mrb[0].mxu0 %v607
        %v737 = vpop.f32.mrb[0].mxu0
        %v738 = vadd.f32 %v629, %v737
        %v739 = vpop.f32.mrb[0].mxu0
        %v740 = vpop.f32.mrb[0].mxu0
        %v741 = vadd.f32 %v629, %v740
        %v742 = vpop.f32.mrb[0].mxu0
        %743 = vdwg.mxu0
        %v744 = vmax.f32 %v714, 0.0
        %v745 = vmax.f32 %v717, 0.0
        %v746 = vmax.f32 %v722, 0.0
        %v747 = vmax.f32 %v725, 0.0
        %v748 = vmax.f32 %v730, 0.0
        %v749 = vmax.f32 %v733, 0.0
        %v750 = vmax.f32 %v738, 0.0
        %v751 = vmax.f32 %v741, 0.0
        %v752 = vpack.c.bf16 %v745, %v744
        %v753 = vpack.c.bf16 %v747, %v746
        %v754 = vpack.c.bf16 %v749, %v748
        %v755 = vpack.c.bf16 %v751, %v750
        %v756 = vld [vmem:[%s7] sm:$0xf]
        %v757 = vld [vmem:[%s7 + $0x4] sm:$0xf]
        %v758 = vld [vmem:[%s7 + $0x8] sm:$0xf]
        %v759 = vld [vmem:[%s7 + $0xc] sm:$0xf]
        %v760 = vld [vmem:[%s7 + $0x10] sm:$0xf]
        %v761 = vld [vmem:[%s7 + $0x14] sm:$0xf]
        %v762 = vld [vmem:[%s7 + $0x18] sm:$0xf]
        %v763 = vld [vmem:[%s7 + $0x1c] sm:$0xf]
        %v764 = vld [vmem:[%s7 + $0x20] sm:$0xf]
        %v765 = vld [vmem:[%s7 + $0x24] sm:$0xf]
        %v766 = vld [vmem:[%s7 + $0x28] sm:$0xf]
        %v767 = vld [vmem:[%s7 + $0x2c] sm:$0xf]
        %v768 = vld [vmem:[%s7 + $0x30] sm:$0xf]
        %v769 = vld [vmem:[%s7 + $0x34] sm:$0xf]
        %v770 = vld [vmem:[%s7 + $0x38] sm:$0xf]
        %v771 = vld [vmem:[%s7 + $0x3c] sm:$0xf]
        %v772 = vld [vmem:[%s8] sm:$0x1]
        %v774 = vlaneseq
        %v775 = vshrl.u32 %v774, 7
        %v776 = vsub.s32 0, %v775
        %v777 = vrot.slane %v772, %v776
        %v795 = vunpack.c.l.b16 %v756
        %v796 = vunpack.c.l.b16 %v757
        %v797 = vunpack.c.l.b16 %v758
        %v798 = vunpack.c.l.b16 %v759
        %v799 = vunpack.c.l.b16 %v760
        %v800 = vunpack.c.l.b16 %v761
        %v801 = vunpack.c.l.b16 %v762
        %v802 = vunpack.c.l.b16 %v763
        %v803 = vunpack.c.l.b16 %v764
        %v804 = vunpack.c.l.b16 %v765
        %v805 = vunpack.c.l.b16 %v766
        %v806 = vunpack.c.l.b16 %v767
        %v807 = vunpack.c.l.b16 %v768
        %v808 = vunpack.c.l.b16 %v769
        %v809 = vunpack.c.l.b16 %v770
        %v810 = vunpack.c.l.b16 %v771
        %v811 = vpack.c.b16 %v796, %v795
        %v812 = vpack.c.b16 %v798, %v797
        %v813 = vpack.c.b16 %v800, %v799
        %v814 = vpack.c.b16 %v802, %v801
        %v815 = vpack.c.b16 %v804, %v803
        %v816 = vpack.c.b16 %v806, %v805
        %v817 = vpack.c.b16 %v808, %v807
        %v818 = vpack.c.b16 %v810, %v809
        %827 = vmatprep.subr.bf16.mxu0 0
        %828 = vmatpush1.bf16.msra.mxu0 %v811
        %829 = vmatprep.subr.bf16.mxu0 0
        %830 = vmatpush1.bf16.msra.mxu0 %v812
        %831 = vmatprep.subr.bf16.mxu0 0
        %832 = vmatpush1.bf16.msra.mxu0 %v813
        %833 = vmatprep.subr.bf16.mxu0 0
        %834 = vmatpush1.bf16.msra.mxu0 %v814
        %835 = vmatprep.subr.bf16.mxu0 0
        %836 = vmatpush1.bf16.msra.mxu0 %v815
        %837 = vmatprep.subr.bf16.mxu0 0
        %838 = vmatpush1.bf16.msra.mxu0 %v816
        %839 = vmatprep.subr.bf16.mxu0 0
        %840 = vmatpush1.bf16.msra.mxu0 %v817
        %841 = vmatprep.subr.bf16.mxu0 0
        %842 = vmatpush1.bf16.msra.mxu0 %v818
        %843 = vmatprep.subr.bf16.mxu0 0
        %844 = vmatpush1.bf16.msra.mxu0 0
        %845 = vmatprep.subr.bf16.mxu0 0
        %846 = vmatpush1.bf16.msra.mxu0 0
        %847 = vmatprep.subr.bf16.mxu0 0
        %848 = vmatpush1.bf16.msra.mxu0 0
        %849 = vmatprep.subr.bf16.mxu0 0
        %850 = vmatpush1.bf16.msra.mxu0 0
        %851 = vmatprep.subr.bf16.mxu0 0
        %852 = vmatpush1.bf16.msra.mxu0 0
        %853 = vmatprep.subr.bf16.mxu0 0
        %854 = vmatpush1.bf16.msra.mxu0 0
        %855 = vmatprep.subr.bf16.mxu0 0
        %856 = vmatpush1.bf16.msra.mxu0 0
        %857 = vmatprep.subr.bf16.mxu0 0
        %858 = vmatpush1.bf16.msra.mxu0 0
        %859 = vmatprep.mubr.bf16.mxu0 0
        %860 = vmatmul.mubr.bf16.gmra.mrb[0].mxu0 %v752
        %v861 = vpop.f32.mrb[0].mxu0
        %v862 = vadd.f32 %v777, %v861
        %v863 = vpop.f32.mrb[0].mxu0
        %v864 = vpop.f32.mrb[0].mxu0
        %v865 = vadd.f32 %v777, %v864
        %v866 = vpop.f32.mrb[0].mxu0
        %867 = vmatprep.mubr.bf16.mxu0 0
        %868 = vmatmul.mubr.bf16.gmra.mrb[0].mxu0 %v753
        %v869 = vpop.f32.mrb[0].mxu0
        %v870 = vadd.f32 %v777, %v869
        %v871 = vpop.f32.mrb[0].mxu0
        %v872 = vpop.f32.mrb[0].mxu0
        %v873 = vadd.f32 %v777, %v872
        %v874 = vpop.f32.mrb[0].mxu0
        %875 = vmatprep.mubr.bf16.mxu0 0
        %876 = vmatmul.mubr.bf16.gmra.mrb[0].mxu0 %v754
        %v877 = vpop.f32.mrb[0].mxu0
        %v878 = vadd.f32 %v777, %v877
        %v879 = vpop.f32.mrb[0].mxu0
        %v880 = vpop.f32.mrb[0].mxu0
        %v881 = vadd.f32 %v777, %v880
        %v882 = vpop.f32.mrb[0].mxu0
        %883 = vmatprep.mubr.bf16.mxu0 0
        %884 = vmatmul.mubr.bf16.gmra.mrb[0].mxu0 %v755
        %v885 = vpop.f32.mrb[0].mxu0
        %v886 = vadd.f32 %v777, %v885
        %v887 = vpop.f32.mrb[0].mxu0
        %v888 = vpop.f32.mrb[0].mxu0
        %v889 = vadd.f32 %v777, %v888
        %v890 = vpop.f32.mrb[0].mxu0
        %891 = vdwg.mxu0
        %v892 = vlaneseq
        %v893 = vand.u32 %v892, 127
        %vm894 = vcmp.lt.s32.totalorder %v893, 6
        %v895 = vsel %vm894, %v862, -inf
        %v896 = vsel %vm894, %v865, -inf
        %v897 = vsel %vm894, %v870, -inf
        %v898 = vsel %vm894, %v873, -inf
        %v899 = vsel %vm894, %v878, -inf
        %v900 = vsel %vm894, %v881, -inf
        %v901 = vsel %vm894, %v886, -inf
        %v902 = vsel %vm894, %v889, -inf
        %903 = vmax.xlane.f32.xlu0 %v895
        %v904 = vpop.xlane.xlu0 %903
        %905 = vmax.xlane.f32.xlu0 %v896
        %v906 = vpop.xlane.xlu0 %905
        %907 = vmax.xlane.f32.xlu0 %v897
        %v908 = vpop.xlane.xlu0 %907
        %909 = vmax.xlane.f32.xlu0 %v898
        %v910 = vpop.xlane.xlu0 %909
        %911 = vmax.xlane.f32.xlu0 %v899
        %v912 = vpop.xlane.xlu0 %911
        %913 = vmax.xlane.f32.xlu0 %v900
        %v914 = vpop.xlane.xlu0 %913
        %915 = vmax.xlane.f32.xlu0 %v901
        %v916 = vpop.xlane.xlu0 %915
        %917 = vmax.xlane.f32.xlu0 %v902
        %v918 = vpop.xlane.xlu0 %917
        %v919 = vsub.f32 %v895, %v904
        %v920 = vsub.f32 %v896, %v906
        %v921 = vsub.f32 %v897, %v908
        %v922 = vsub.f32 %v898, %v910
        %v923 = vsub.f32 %v899, %v912
        %v924 = vsub.f32 %v900, %v914
        %v925 = vsub.f32 %v901, %v916
        %v926 = vsub.f32 %v902, %v918
        %v927 = vmul.f32 %v919, 1.442695
        %v928 = vpow.pop %v927
        %v929 = vmul.f32 %v920, 1.442695
        %v930 = vpow.pop %v929
        %v931 = vmul.f32 %v921, 1.442695
        %v932 = vpow.pop %v931
        %v933 = vmul.f32 %v922, 1.442695
        %v934 = vpow.pop %v933
        %v935 = vmul.f32 %v923, 1.442695
        %v936 = vpow.pop %v935
        %v937 = vmul.f32 %v924, 1.442695
        %v938 = vpow.pop %v937
        %v939 = vmul.f32 %v925, 1.442695
        %v940 = vpow.pop %v939
        %v941 = vmul.f32 %v926, 1.442695
        %v942 = vpow.pop %v941
        %943 = vadd.xlane.f32.xlu0 %v928
        %v944 = vpop.xlane.xlu0 %943
        %945 = vadd.xlane.f32.xlu0 %v930
        %v946 = vpop.xlane.xlu0 %945
        %947 = vadd.xlane.f32.xlu0 %v932
        %v948 = vpop.xlane.xlu0 %947
        %949 = vadd.xlane.f32.xlu0 %v934
        %v950 = vpop.xlane.xlu0 %949
        %951 = vadd.xlane.f32.xlu0 %v936
        %v952 = vpop.xlane.xlu0 %951
        %953 = vadd.xlane.f32.xlu0 %v938
        %v954 = vpop.xlane.xlu0 %953
        %955 = vadd.xlane.f32.xlu0 %v940
        %v956 = vpop.xlane.xlu0 %955
        %957 = vadd.xlane.f32.xlu0 %v942
        %v958 = vpop.xlane.xlu0 %957
        %v959 = vrcp.pop %v944
        %v960 = vrcp.pop %v946
        %v961 = vrcp.pop %v948
        %v962 = vrcp.pop %v950
        %v963 = vrcp.pop %v952
        %v964 = vrcp.pop %v954
        %v965 = vrcp.pop %v956
        %v966 = vrcp.pop %v958
        %v967 = vmul.f32 %v944, %v959
        %v968 = vmul.f32 %v946, %v960
        %v969 = vmul.f32 %v948, %v961
        %v970 = vmul.f32 %v950, %v962
        %v971 = vmul.f32 %v952, %v963
        %v972 = vmul.f32 %v954, %v964
        %v973 = vmul.f32 %v956, %v965
        %v974 = vmul.f32 %v958, %v966
        %v975 = vsub.f32 2.0, %v967
        %v976 = vsub.f32 2.0, %v968
        %v977 = vsub.f32 2.0, %v969
        %v978 = vsub.f32 2.0, %v970
        %v979 = vsub.f32 2.0, %v971
        %v980 = vsub.f32 2.0, %v972
        %v981 = vsub.f32 2.0, %v973
        %v982 = vsub.f32 2.0, %v974
        %v983 = vmul.f32 %v959, %v975
        %v984 = vmul.f32 %v960, %v976
        %v985 = vmul.f32 %v961, %v977
        %v986 = vmul.f32 %v962, %v978
        %v987 = vmul.f32 %v963, %v979
        %v988 = vmul.f32 %v964, %v980
        %v989 = vmul.f32 %v965, %v981
        %v990 = vmul.f32 %v966, %v982
        %v991 = vmul.f32 %v928, %v983
        %v992 = vmul.f32 %v930, %v984
        %v993 = vmul.f32 %v932, %v985
        %v994 = vmul.f32 %v934, %v986
        %v995 = vmul.f32 %v936, %v987
        %v996 = vmul.f32 %v938, %v988
        %v997 = vmul.f32 %v940, %v989
        %v998 = vmul.f32 %v942, %v990
        %999 = vrot.lane.b32.xlu0 %v991, 64
        %v1000 = vpop.permute.xlu0 %999
        %1001 = vrot.lane.b32.xlu0 %v992, 64
        %v1002 = vpop.permute.xlu0 %1001
        %1003 = vrot.lane.b32.xlu0 %v993, 64
        %v1004 = vpop.permute.xlu0 %1003
        %1005 = vrot.lane.b32.xlu0 %v994, 64
        %v1006 = vpop.permute.xlu0 %1005
        %1007 = vrot.lane.b32.xlu0 %v995, 64
        %v1008 = vpop.permute.xlu0 %1007
        %1009 = vrot.lane.b32.xlu0 %v996, 64
        %v1010 = vpop.permute.xlu0 %1009
        %1011 = vrot.lane.b32.xlu0 %v997, 64
        %v1012 = vpop.permute.xlu0 %1011
        %1013 = vrot.lane.b32.xlu0 %v998, 64
        %v1014 = vpop.permute.xlu0 %1013
        %v1015 = vadd.f32 %v862, %v1000
        %v1016 = vadd.f32 %v865, %v1002
        %v1017 = vadd.f32 %v870, %v1004
        %v1018 = vadd.f32 %v873, %v1006
        %v1019 = vadd.f32 %v878, %v1008
        %v1020 = vadd.f32 %v881, %v1010
        %v1021 = vadd.f32 %v886, %v1012
        %v1022 = vadd.f32 %v889, %v1014
        %1023 = vst [vmem:[%s326] sm:$0xff] %v1015
        %1024 = vst [vmem:[%s326 + $0x8] sm:$0xff] %v1016
        %1025 = vst [vmem:[%s326 + $0x10] sm:$0xff] %v1017
        %1026 = vst [vmem:[%s326 + $0x18] sm:$0xff] %v1018
        %1027 = vst [vmem:[%s326 + $0x20] sm:$0xff] %v1019
        %1028 = vst [vmem:[%s326 + $0x28] sm:$0xff] %v1020
        %1029 = vst [vmem:[%s326 + $0x30] sm:$0xff] %v1021
        %1030 = vst [vmem:[%s326 + $0x38] sm:$0xff] %v1022
        %s1031 = sand.u32 %s225, 1
        %s1032 = scalar_lea.sflag [#allocation3], %s1031
        %s1033 = sand.u32 %s225, 1
        %s1034 = smul.addr %s1033, 64
        %s1035 = scalar_lea.vmem [#allocation2], %s1034
        // Predicated region
        $region57: #{tpu_custom_call.1} parent=55 // pred_check
          %p1036 = pneg %p235
        $region58: #{tpu_custom_call.1} parent=55 // pred_check_branch
          %1038 = sbr.rel (%p1036) target = $region60
        $region59: #{tpu_custom_call.1} parent=55 // pred_region
          %s1039 = smul.u32 8, %s23
          %s1041 = ssub.s32 1024, 1024
          %1042 = vsyncadd %s1032, %s1041
          %s1043 = smul.addr %s1039, 128
          %s1044 = scalar_lea.hbm %s9, %s1043
          %s1045 = sshll.u32 %s1035, 4
          %s1046 = int_to_ptr.vmem [resolvable:$true] %s1045
          %1051 = dma.vmem_to_hbm [thread:$0]  %s1046, 1024, %s1044, %s1032, 128, 128, 8
        $region60: #{tpu_custom_call.1} parent=55 // pred_fallthru
          _
      $region56: #{tpu_custom_call.1} parent=5 // pred_fallthru
        _
      %p1052 = scmp.le.s32.totalorder 2, %s18
      // Predicated region
      $region61: #{tpu_custom_call.1} parent=5 // pred_check
        %p1053 = pneg %p1052
      $region62: #{tpu_custom_call.1} parent=5 // pred_check_branch
        %1055 = sbr.rel (%p1053) target = $region64
      $region63: #{tpu_custom_call.1} parent=5 // pred_region
        %s1056 = ssub.s32 %s18, 2
        // Predicated region
        $region65: #{tpu_custom_call.1} parent=63 // pred_check
          %p1057 = pneg %p241
        $region66: #{tpu_custom_call.1} parent=63 // pred_check_branch
          %1059 = sbr.rel (%p1057) target = $region68
        $region67: #{tpu_custom_call.1} parent=63 // pred_region
          %s1060 = sand.u32 %s226, 1
          %s1061 = scalar_lea.sflag [#allocation3], %s1060
          %s1062 = sand.u32 %s226, 1
          %s1063 = smul.addr %s1062, 64
          %s1064 = scalar_lea.vmem [#allocation2], %s1063
          %1065 = dma.done %s1061, 1024
        $region68: #{tpu_custom_call.1} parent=63 // pred_fallthru
          _
      $region64: #{tpu_custom_call.1} parent=5 // pred_fallthru
        _
    $region6: #{tpu_custom_call.1} parent=1 // loop_footer
      %s22 = sadd.s32 1, %s18
    $region7: #{tpu_custom_call.1} parent=1 // loop_footer_branch
      %17 = sbr.rel target = $region3
    $region8: #{tpu_custom_call.1} parent=1 // loop_exit
      _
    %1066 = vsyncpa [#allocation3], 1
    %s1067 = scalar_lea.sflag [#allocation3], 1
    %1068 = vsyncpa %s1067, 1

</llo_original>
